<compile_context>
chip_gen: v6e
topology: v6e:2x2x1
jax: 0.10.0
libtpu: 0.0.40
codegen_flags: <defaults>
</compile_context>

<pallas_src>
import jax
import jax.numpy as jnp
from jax import lax
from jax.experimental import pallas as pl
from jax.experimental.pallas import tpu as pltpu


# ---------------------------------------------------------------------------
# Small helpers
# ---------------------------------------------------------------------------

def _round_up(x, m):
    return ((x + m - 1) // m) * m


def _pad_rows(x, rows):
    if x.shape[0] == rows:
        return x
    return jnp.pad(x, ((0, rows - x.shape[0]), (0, 0)))


def _tpu_vmem_bytes():
    """Best-effort physical VMEM query; conservative 64 MiB fallback."""
    try:
        info = pltpu.get_tpu_info()
        for attr in ("vmem_capacity_bytes", "vmem_bytes", "vmem_size_bytes"):
            v = getattr(info, attr, None)
            if v:
                return int(v)
    except Exception:
        pass
    return 64 * 1024 * 1024


def _pick_eval_tn(N, R, ent_isz, out_isz, tb_cap, vmem_limit, tn_cap):
    """Largest entity tile (multiple of 128) whose double-buffered footprint
    (out + ent + lhs + bias blocks) fits ~80% of the vmem limit, assuming the
    worst-case batch tile tb_cap."""
    tn = min(tn_cap, _round_up(max(N, 1), 128))
    budget = int(vmem_limit * 0.8)

    def fits(t):
        return (2 * tb_cap * t * out_isz          # output double buffer
                + 2 * t * R * ent_isz             # entity double buffer
                + 2 * tb_cap * R * ent_isz        # lhs double buffer
                + 2 * tb_cap * 4 + 2 * t * 4      # bh / bt bias blocks
                ) <= budget

    while tn > 128 and not fits(tn):
        tn = max(128, (tn // 2) // 128 * 128)
    n_pad = _round_up(N, tn)
    return tn, n_pad


def _pair_tiles(B):
    # Whole batch in one grid step up to 4096 rows (traffic is tiny; the call
    # is fixed-cost dominated). Beyond that, tile with a 128-aligned TB.
    if B <= 4096:
        tb = max(8, _round_up(B, 8))
        return tb, tb
    return 4096, _round_up(B, 4096)


# ---------------------------------------------------------------------------
# Pallas kernels
# ---------------------------------------------------------------------------

def _eval_learn_kernel(lhs_ref, ent_ref, bh_ref, bt_ref, out_ref):
    """out[TB, TN] = lhs @ ent.T (contracting last dims, no transpose) + bh + bt_row."""
    scores = lax.dot_general(
        lhs_ref[...], ent_ref[...],
        dimension_numbers=(((1,), (1,)), ((), ())),
        preferred_element_type=jnp.float32)
    out_ref[...] = (scores + bh_ref[...] + bt_ref[...]).astype(out_ref.dtype)


def _eval_gamma_kernel(gamma_ref, lhs_ref, ent_ref, out_ref):
    """out[TB, TN] = gamma + lhs @ ent.T  (gamma is a (1,1) SMEM scalar)."""
    scores = lax.dot_general(
        lhs_ref[...], ent_ref[...],
        dimension_numbers=(((1,), (1,)), ((), ())),
        preferred_element_type=jnp.float32)
    out_ref[...] = (scores + gamma_ref[0, 0]).astype(out_ref.dtype)


def _eval_plain_kernel(lhs_ref, ent_ref, out_ref):
    """out[TB, TN] = lhs @ ent.T  (bias == 'none': no epilogue add)."""
    scores = lax.dot_general(
        lhs_ref[...], ent_ref[...],
        dimension_numbers=(((1,), (1,)), ((), ())),
        preferred_element_type=jnp.float32)
    out_ref[...] = scores.astype(out_ref.dtype)


def _pair_learn_kernel(lhs_ref, rhs_ref, bh_ref, bt_ref, out_ref):
    """Lane-dense train scoring: out[1, TB] = sum(lhs*rhs, -1) + bh_row + bt_row."""
    prod = lhs_ref[...].astype(jnp.float32) * rhs_ref[...].astype(jnp.float32)
    s = jnp.sum(prod, axis=-1)                       # (TB,)
    out_ref[...] = (s[None, :] + bh_ref[...] + bt_ref[...]).astype(out_ref.dtype)


def _pair_gamma_kernel(gamma_ref, lhs_ref, rhs_ref, out_ref):
    prod = lhs_ref[...].astype(jnp.float32) * rhs_ref[...].astype(jnp.float32)
    s = jnp.sum(prod, axis=-1)
    out_ref[...] = (s[None, :] + gamma_ref[0, 0]).astype(out_ref.dtype)


def _pair_plain_kernel(lhs_ref, rhs_ref, out_ref):
    prod = lhs_ref[...].astype(jnp.float32) * rhs_ref[...].astype(jnp.float32)
    s = jnp.sum(prod, axis=-1)
    out_ref[...] = s[None, :].astype(out_ref.dtype)


# ---------------------------------------------------------------------------
# pallas_call wrappers
# ---------------------------------------------------------------------------

def score_eval(lhs_e, bh, ent_p, bt_row, *, bias, gamma, N, TN, N_pad, TB_cap,
               vmem_limit, compute_dtype=None, out_dtype=jnp.float32):
    """Eval-mode scoring against a prepared (padded / compute-dtype) entity table.

    ent_p:  (N_pad, R) entity table, already padded+cast at init.
    bt_row: (1, N_pad) f32 tail-bias row, already padded at init.
    """
    B, R = lhs_e.shape
    if compute_dtype is not None:
        lhs_e = lhs_e.astype(compute_dtype)
    if B <= TB_cap:
        TB = max(8, _round_up(B, 8))
        B_pad = TB
    else:
        TB = TB_cap
        B_pad = _round_up(B, TB)
    lhs_p = _pad_rows(lhs_e, B_pad)

    # Entity tiles on the OUTER grid axis, batch tiles on the INNER axis:
    # the entity block index is constant across the inner axis, so each entity
    # tile is streamed from HBM exactly once per call.
    grid = (N_pad // TN, B_pad // TB)
    # TODO(synk): on v7x a (1,1) grid leaves one TensorCore idle; only matters
    # for toy shapes where the kernel is already trivially fast.
    lhs_spec = pl.BlockSpec((TB, R), lambda j, i: (i, 0))
    ent_spec = pl.BlockSpec((TN, R), lambda j, i: (j, 0))
    out_spec = pl.BlockSpec((TB, TN), lambda j, i: (i, j))
    cparams = pltpu.CompilerParams(
        dimension_semantics=("parallel", "parallel"),
        vmem_limit_bytes=vmem_limit)
    out_shape = jax.ShapeDtypeStruct((B_pad, N_pad), out_dtype)

    if bias == 'learn':
        bh_p = _pad_rows(bh.astype(jnp.float32), B_pad)
        out = pl.pallas_call(
            _eval_learn_kernel, out_shape=out_shape, grid=grid,
            in_specs=[lhs_spec, ent_spec,
                      pl.BlockSpec((TB, 1), lambda j, i: (i, 0)),
                      pl.BlockSpec((1, TN), lambda j, i: (0, j))],
            out_specs=out_spec, compiler_params=cparams,
        )(lhs_p, ent_p, bh_p, bt_row)
    elif bias == 'constant':
        gamma_arr = jnp.asarray(gamma, jnp.float32).reshape(1, 1)
        out = pl.pallas_call(
            _eval_gamma_kernel, out_shape=out_shape, grid=grid,
            in_specs=[pl.BlockSpec(memory_space=pltpu.MemorySpace.SMEM),
                      lhs_spec, ent_spec],
            out_specs=out_spec, compiler_params=cparams,
        )(gamma_arr, lhs_p, ent_p)
    else:  # 'none'
        out = pl.pallas_call(
            _eval_plain_kernel, out_shape=out_shape, grid=grid,
            in_specs=[lhs_spec, ent_spec],
            out_specs=out_spec, compiler_params=cparams,
        )(lhs_p, ent_p)

    # No-op whenever B % 8 == 0 and N % TN == 0 (padding arranged to make
    # this the common case), so the big [B, N] writeback is not re-copied.
    if B_pad != B or N_pad != N:
        out = out[:B, :N]
    return out


def score_pair(lhs_e, rhs_e, bh, bt, *, bias, gamma, vmem_limit,
               compute_dtype=None):
    """Train-mode scoring: [B, 1] = bias(+) sum(lhs*rhs, -1, keepdim)."""
    B, R = lhs_e.shape
    TB, B_pad = _pair_tiles(B)
    if compute_dtype is not None:
        lhs_e = lhs_e.astype(compute_dtype)
        rhs_e = rhs_e.astype(compute_dtype)
    lhs_p = _pad_rows(lhs_e, B_pad)
    rhs_p = _pad_rows(rhs_e, B_pad)

    grid = (B_pad // TB,)
    vec_spec = pl.BlockSpec((TB, R), lambda i: (i, 0))
    row_spec = pl.BlockSpec((1, TB), lambda i: (0, i))
    cparams = pltpu.CompilerParams(
        dimension_semantics=("parallel",), vmem_limit_bytes=vmem_limit)
    out_shape = jax.ShapeDtypeStruct((1, B_pad), jnp.float32)

    if bias == 'learn':
        bh_row = _pad_rows(bh.astype(jnp.float32), B_pad).reshape(1, B_pad)
        bt_row = _pad_rows(bt.astype(jnp.float32), B_pad).reshape(1, B_pad)
        out = pl.pallas_call(
            _pair_learn_kernel, out_shape=out_shape, grid=grid,
            in_specs=[vec_spec, vec_spec, row_spec, row_spec],
            out_specs=row_spec, compiler_params=cparams,
        )(lhs_p, rhs_p, bh_row, bt_row)
    elif bias == 'constant':
        gamma_arr = jnp.asarray(gamma, jnp.float32).reshape(1, 1)
        out = pl.pallas_call(
            _pair_gamma_kernel, out_shape=out_shape, grid=grid,
            in_specs=[pl.BlockSpec(memory_space=pltpu.MemorySpace.SMEM),
                      vec_spec, vec_spec],
            out_specs=row_spec, compiler_params=cparams,
        )(gamma_arr, lhs_p, rhs_p)
    else:  # 'none'
        out = pl.pallas_call(
            _pair_plain_kernel, out_shape=out_shape, grid=grid,
            in_specs=[vec_spec, vec_spec],
            out_specs=row_spec, compiler_params=cparams,
        )(lhs_p, rhs_p)

    return out[0, :B][:, None]


# ---------------------------------------------------------------------------
# Model wrapper (parameter setup + embedding gather are plain-JAX glue)
# ---------------------------------------------------------------------------

class KGModelPallas:
    def __init__(self, sizes, rank, dropout, gamma, data_type, bias, init_size,
                 key, compute_dtype=None, eval_out_dtype=jnp.float32):
        assert data_type == 'float'
        self.sizes = sizes
        self.rank = rank
        self.dropout = dropout      # TODO(synk): dropout is unused in the base forward path (matches spec)
        self.bias = bias
        self.init_size = init_size
        # compute_dtype=jnp.bfloat16 halves the entity-read bytes (biggest lever
        # on v5e) while keeping f32 accumulation; None keeps exact f32 semantics.
        self.compute_dtype = compute_dtype
        # eval_out_dtype=jnp.bfloat16 halves the dominant [B, N] writeback stream.
        self.eval_out_dtype = eval_out_dtype
        self.gamma = jnp.array([gamma], dtype=jnp.float32)

        k_ent, k_rel = jax.random.split(key)
        self.entity = (init_size *
                       jax.random.normal(k_ent, (sizes[0], rank), jnp.float32))
        self.rel = (init_size *
                    jax.random.normal(k_rel, (sizes[1], rank), jnp.float32))
        self.bh = jnp.zeros((sizes[0], 1), jnp.float32)
        self.bt = jnp.zeros((sizes[0], 1), jnp.float32)

        # ---- generation-aware VMEM budget & eval tile sizes -----------------
        phys_vmem = max(_tpu_vmem_bytes(), 32 * 1024 * 1024)
        self._vmem_limit = max(32 << 20, min(96 << 20, (phys_vmem * 3) // 4))
        big_vmem = self._vmem_limit >= (64 << 20)      # v5e / v6e (128 MiB phys)
        self._TB_cap = 512 if big_vmem else 256        # v7x capped at 256
        tn_cap = 8192 if big_vmem else 4096
        ent_isz = jnp.dtype(compute_dtype or jnp.float32).itemsize
        out_isz = jnp.dtype(eval_out_dtype).itemsize
        self._TN, self._N_pad = _pick_eval_tn(
            sizes[0], rank, ent_isz, out_isz, self._TB_cap,
            self._vmem_limit, tn_cap)
        # TODO(synk): for rank >= ~1024 a K grid axis with a VMEM accumulator
        # would keep TN large on v7x; _pick_eval_tn just shrinks TN instead.

        # ---- one-time padded / compute-dtype copies for the eval stream -----
        self._ent_eval = None
        self._bt_row = None
        self.refresh_eval_tables()

    def refresh_eval_tables(self):
        """(Re)build the padded eval-mode entity table & bt row.
        Call after updating self.entity / self.bt (e.g. after a training step)."""
        ent = self.entity
        if self.compute_dtype is not None:
            ent = ent.astype(self.compute_dtype)
        self._ent_eval = _pad_rows(ent, self._N_pad)
        self._bt_row = _pad_rows(self.bt.astype(jnp.float32),
                                 self._N_pad).reshape(1, self._N_pad)

    # ---- concrete instantiations of the abstract methods -----------------
    # TODO(synk): train-mode embedding gathers stay as XLA jnp.take (a fused
    # per-row scalar-prefetch gather would force a grid step per query row and
    # be overhead-dominated at these ranks).
    def get_queries(self, queries):
        head_e = jnp.take(self.entity, queries[:, 0], axis=0)
        rel_e = jnp.take(self.rel, queries[:, 1], axis=0)
        lhs_biases = jnp.take(self.bh, queries[:, 0], axis=0)
        return head_e * rel_e, lhs_biases

    def get_rhs(self, queries, eval_mode):
        if eval_mode:
            return self.entity, self.bt
        rhs_e = jnp.take(self.entity, queries[:, 2], axis=0)
        rhs_biases = jnp.take(self.bt, queries[:, 2], axis=0)
        return rhs_e, rhs_biases

    # ---- score (hot path runs in the Pallas kernels) ----------------------
    def score(self, lhs, rhs, eval_mode):
        lhs_e, lhs_biases = lhs
        rhs_e, rhs_biases = rhs
        gamma = self.gamma[0]
        if eval_mode:
            if rhs_e is self.entity and rhs_biases is self.bt:
                # Fast path: use the tables prepared once at init.
                ent_p, bt_row = self._ent_eval, self._bt_row
                N, TN, N_pad = self.sizes[0], self._TN, self._N_pad
            else:
                # Generic candidate set: prepare on the fly (rare path).
                N = rhs_e.shape[0]
                ent_isz = jnp.dtype(self.compute_dtype or jnp.float32).itemsize
                out_isz = jnp.dtype(self.eval_out_dtype).itemsize
                TN, N_pad = _pick_eval_tn(N, self.rank, ent_isz, out_isz,
                                          self._TB_cap, self._vmem_limit,
                                          8192 if self._TB_cap == 512 else 4096)
                ent = rhs_e.astype(self.compute_dtype) if self.compute_dtype else rhs_e
                ent_p = _pad_rows(ent, N_pad)
                bt_row = _pad_rows(rhs_biases.astype(jnp.float32),
                                   N_pad).reshape(1, N_pad)
            return score_eval(lhs_e, lhs_biases, ent_p, bt_row,
                              bias=self.bias, gamma=gamma,
                              N=N, TN=TN, N_pad=N_pad, TB_cap=self._TB_cap,
                              vmem_limit=self._vmem_limit,
                              compute_dtype=self.compute_dtype,
                              out_dtype=self.eval_out_dtype)
        return score_pair(lhs_e, rhs_e, lhs_biases, rhs_biases,
                          bias=self.bias, gamma=gamma,
                          vmem_limit=self._vmem_limit,
                          compute_dtype=self.compute_dtype)

    def get_factors(self, queries):
        head_e = jnp.take(self.entity, queries[:, 0], axis=0)
        rel_e = jnp.take(self.rel, queries[:, 1], axis=0)
        rhs_e = jnp.take(self.entity, queries[:, 2], axis=0)
        return head_e, rel_e, rhs_e

    def forward(self, queries, eval_mode=False):
        lhs_e, lhs_biases = self.get_queries(queries)
        rhs_e, rhs_biases = self.get_rhs(queries, eval_mode)
        predictions = self.score((lhs_e, lhs_biases), (rhs_e, rhs_biases),
                                 eval_mode)
        factors = self.get_factors(queries)
        return predictions, factors


# ---------------------------------------------------------------------------
# Main
# ---------------------------------------------------------------------------

if __name__ == "__main__":
    key = jax.random.PRNGKey(0)
    k_model, k_q = jax.random.split(key)

    sizes = (256, 16)        # (num entities, num relations)
    rank = 32
    batch = 8

    model = KGModelPallas(sizes=sizes, rank=rank, dropout=0.0, gamma=1.5,
                          data_type='float', bias='learn', init_size=0.001,
                          key=k_model)

    # queries: [batch, 3] = (head, relation, tail)
    kh, kr, kt = jax.random.split(k_q, 3)
    queries = jnp.stack([
        jax.random.randint(kh, (batch,), 0, sizes[0]),
        jax.random.randint(kr, (batch,), 0, sizes[1]),
        jax.random.randint(kt, (batch,), 0, sizes[0]),
    ], axis=1).astype(jnp.int32)

    # --- bias = 'learn' -----------------------------------------------------
    preds_eval, factors = model.forward(queries, eval_mode=True)
    preds_eval = jax.block_until_ready(preds_eval)
    preds_pair, _ = model.forward(queries, eval_mode=False)
    preds_pair = jax.block_until_ready(preds_pair)

    # Pure-JAX references.
    lhs_e, bh = model.get_queries(queries)
    rhs_e, bt = model.get_rhs(queries, eval_mode=False)
    sim_eval = lhs_e @ model.entity.T
    sim_pair = jnp.sum(lhs_e * rhs_e, axis=-1, keepdims=True)
    ref_eval = sim_eval + bh + model.bt.T
    ref_pair = sim_pair + bh + bt

    assert preds_eval.shape == (batch, sizes[0])
    assert preds_pair.shape == (batch, 1)
    assert jnp.allclose(preds_eval, ref_eval, atol=1e-5, rtol=1e-5)
    assert jnp.allclose(preds_pair, ref_pair, atol=1e-5, rtol=1e-5)
    assert factors[0].shape == (batch, rank)

    # --- bias = 'constant' (gamma folded into the kernel epilogue) ----------
    model.bias = 'constant'
    preds_c_eval, _ = model.forward(queries, eval_mode=True)
    preds_c_pair, _ = model.forward(queries, eval_mode=False)
    preds_c_eval = jax.block_until_ready(preds_c_eval)
    assert jnp.allclose(preds_c_eval, model.gamma[0] + sim_eval,
                        atol=1e-5, rtol=1e-5)
    assert jnp.allclose(preds_c_pair, model.gamma[0] + sim_pair,
                        atol=1e-5, rtol=1e-5)

    # --- bias = 'none' (dedicated no-add kernels) ----------------------------
    model.bias = 'none'
    preds_n_eval, _ = model.forward(queries, eval_mode=True)
    preds_n_pair, _ = model.forward(queries, eval_mode=False)
    preds_n_eval = jax.block_until_ready(preds_n_eval)
    assert jnp.allclose(preds_n_eval, sim_eval, atol=1e-5, rtol=1e-5)
    assert jnp.allclose(preds_n_pair, sim_pair, atol=1e-5, rtol=1e-5)

    print("KERNEL_OK")
</pallas_src>

<mosaic_0001>
module attributes {stable_mosaic.version = 11 : i64} {
  func.func @_eval_learn_kernel(%arg0: i32, %arg1: i32, %arg2: memref<8x32xf32, #tpu.memory_space<vmem>>, %arg3: memref<256x32xf32, #tpu.memory_space<vmem>>, %arg4: memref<8x1xf32, #tpu.memory_space<vmem>>, %arg5: memref<1x256xf32, #tpu.memory_space<vmem>>, %arg6: memref<8x256xf32, #tpu.memory_space<vmem>>) attributes {dimension_semantics = [#tpu.dimension_semantics<parallel>, #tpu.dimension_semantics<parallel>], iteration_bounds = array<i64: 1, 1>, scalar_prefetch = 0 : i64, scratch_operands = 0 : i64, tpu.core_type = #tpu.core_type<tc>, window_params = [{transform_indices = @transform_0, window_bounds = array<i64: 8, 32>}, {transform_indices = @transform_1, window_bounds = array<i64: 256, 32>}, {transform_indices = @transform_2, window_bounds = array<i64: 8, 1>}, {transform_indices = @transform_3, window_bounds = array<i64: 1, 256>}, {transform_indices = @transform_4, window_bounds = array<i64: 8, 256>}]} {
    %c0 = arith.constant 0 : index
    %c0_0 = arith.constant 0 : index
    %0 = vector.load %arg2[%c0, %c0_0] : memref<8x32xf32, #tpu.memory_space<vmem>>, vector<8x32xf32>
    %c0_1 = arith.constant 0 : index
    %c0_2 = arith.constant 0 : index
    %1 = vector.load %arg3[%c0_1, %c0_2] : memref<256x32xf32, #tpu.memory_space<vmem>>, vector<256x32xf32>
    %cst = arith.constant dense<0.000000e+00> : vector<8x256xf32>
    %2 = tpu.matmul %0, %1, %cst {dimension_numbers = #tpu.dot_dimension_numbers<[1], [1], [0], [0], [0, 0, 1, 0], [], []>} : vector<8x32xf32>, vector<256x32xf32>, vector<8x256xf32> -> vector<8x256xf32>
    %c0_3 = arith.constant 0 : index
    %c0_4 = arith.constant 0 : index
    %3 = vector.load %arg4[%c0_3, %c0_4] : memref<8x1xf32, #tpu.memory_space<vmem>>, vector<8x1xf32>
    %4 = vector.broadcast %3 : vector<8x1xf32> to vector<8x256xf32>
    %5 = arith.addf %2, %4 : vector<8x256xf32>
    %c0_5 = arith.constant 0 : index
    %c0_6 = arith.constant 0 : index
    %6 = vector.load %arg5[%c0_5, %c0_6] : memref<1x256xf32, #tpu.memory_space<vmem>>, vector<1x256xf32>
    %7 = vector.broadcast %6 : vector<1x256xf32> to vector<8x256xf32>
    %8 = arith.addf %5, %7 : vector<8x256xf32>
    %c0_7 = arith.constant 0 : index
    %c0_8 = arith.constant 0 : index
    %9 = vector.load %arg6[%c0_7, %c0_8] : memref<8x256xf32, #tpu.memory_space<vmem>>, vector<8x256xf32>
    tpu.vector_store %arg6[%c0_7, %c0_8], %8 {strides = array<i32>} : memref<8x256xf32, #tpu.memory_space<vmem>>, vector<8x256xf32>,
    return
  }
  func.func @transform_0(%arg0: i32, %arg1: i32) -> (i32, i32) {
    %c0_i32 = arith.constant 0 : i32
    %c0_i32_0 = arith.constant 0 : i32
    return %arg1, %c0_i32 : i32, i32
  }
  func.func @transform_1(%arg0: i32, %arg1: i32) -> (i32, i32) {
    %c0_i32 = arith.constant 0 : i32
    %c0_i32_0 = arith.constant 0 : i32
    return %arg0, %c0_i32 : i32, i32
  }
  func.func @transform_2(%arg0: i32, %arg1: i32) -> (i32, i32) {
    %c0_i32 = arith.constant 0 : i32
    %c0_i32_0 = arith.constant 0 : i32
    return %arg1, %c0_i32 : i32, i32
  }
  func.func @transform_3(%arg0: i32, %arg1: i32) -> (i32, i32) {
    %c0_i32 = arith.constant 0 : i32
    %c0_i32_0 = arith.constant 0 : i32
    return %c0_i32, %arg0 : i32, i32
  }
  func.func @transform_4(%arg0: i32, %arg1: i32) -> (i32, i32) {
    %c0_i32 = arith.constant 0 : i32
    return %arg1, %arg0 : i32, i32
  }
}

</mosaic_0001>

<llo_original>
// kernel: tpu_custom_call.1
$region0: #{tpu_custom_call.1}
  #allocation0 [shape = 'u32[]', space=smem, size = 0x4, offset = 0x4, fixed_abs, tag = 'smem constant byte address 0x4 - core index']
  #allocation1 [shape = 'u32[144,128]{1,0:T(1,128)}', space=vmem, size = 0x12000, scoped, tag = 'internal scratch']
  %s0 = inlined_call_operand.vmem [shape: f32[8,32], index: 0, kind: input, shape index: {}]
  %s1 = inlined_call_operand.vmem [shape: f32[256,32], index: 1, kind: input, shape index: {}]
  %s2 = inlined_call_operand.vmem [shape: f32[8,1], index: 2, kind: input, shape index: {}]
  %s3 = inlined_call_operand.vmem [shape: f32[1,256], index: 3, kind: input, shape index: {}]
  %s4 = inlined_call_operand.hbm [shape: f32[8,256], index: 4, kind: output, shape index: {}]
  %s5 = sld [smem:[#allocation0]]
  $region26: #{tpu_custom_call.1} parent=0
    _
  %s7 = ssub.s32 1, %s5
  %s8 = scalar_select 0, %s7, %s5
  $region1: #{tpu_custom_call.1} parent=0
    #allocation2 [shape = 'u8[8192]{0}', space=vmem, size = 0x2000, scoped, tag = 'output window, operand 0, single buffered']
    #allocation3 [shape = 's32[1]{0}', space=sflag, size = 0x4, scoped, tag = 'scoped memory for tpu_custom_call.1']
    %9 = vsyncpa [#allocation3], 0
    // Predicated region
    $region2: #{tpu_custom_call.1} parent=1 // pred_check
      _
    $region3: #{tpu_custom_call.1} parent=1 // pred_check_branch
      %11 = sbr.rel (0) target = $region5
    $region4: #{tpu_custom_call.1} parent=1 // pred_region
      _
    $region5: #{tpu_custom_call.1} parent=1 // pred_fallthru
      _
    // Predicated region
    $region6: #{tpu_custom_call.1} parent=1 // pred_check
      _
    $region7: #{tpu_custom_call.1} parent=1 // pred_check_branch
      %13 = sbr.rel (0) target = $region9
    $region8: #{tpu_custom_call.1} parent=1 // pred_region
      _
    $region9: #{tpu_custom_call.1} parent=1 // pred_fallthru
      _
    // Predicated region
    $region10: #{tpu_custom_call.1} parent=1 // pred_check
      _
    $region11: #{tpu_custom_call.1} parent=1 // pred_check_branch
      %15 = sbr.rel (0) target = $region13
    $region12: #{tpu_custom_call.1} parent=1 // pred_region
      _
    $region13: #{tpu_custom_call.1} parent=1 // pred_fallthru
      _
    // Predicated region
    $region14: #{tpu_custom_call.1} parent=1 // pred_check
      _
    $region15: #{tpu_custom_call.1} parent=1 // pred_check_branch
      %17 = sbr.rel (0) target = $region17
    $region16: #{tpu_custom_call.1} parent=1 // pred_region
      _
    $region17: #{tpu_custom_call.1} parent=1 // pred_fallthru
      _
    %v18 = vld [vmem:[%s0] sm:$0xff]
    %v19 = vld [vmem:[%s1] sm:$0xff]
    %v20 = vld [vmem:[%s1 + $0x8] sm:$0xff]
    %v21 = vld [vmem:[%s1 + $0x10] sm:$0xff]
    %v22 = vld [vmem:[%s1 + $0x18] sm:$0xff]
    %v23 = vld [vmem:[%s1 + $0x20] sm:$0xff]
    %v24 = vld [vmem:[%s1 + $0x28] sm:$0xff]
    %v25 = vld [vmem:[%s1 + $0x30] sm:$0xff]
    %v26 = vld [vmem:[%s1 + $0x38] sm:$0xff]
    %v27 = vld [vmem:[%s1 + $0x40] sm:$0xff]
    %v28 = vld [vmem:[%s1 + $0x48] sm:$0xff]
    %v29 = vld [vmem:[%s1 + $0x50] sm:$0xff]
    %v30 = vld [vmem:[%s1 + $0x58] sm:$0xff]
    %v31 = vld [vmem:[%s1 + $0x60] sm:$0xff]
    %v32 = vld [vmem:[%s1 + $0x68] sm:$0xff]
    %v33 = vld [vmem:[%s1 + $0x70] sm:$0xff]
    %v34 = vld [vmem:[%s1 + $0x78] sm:$0xff]
    %v35 = vld [vmem:[%s1 + $0x80] sm:$0xff]
    %v36 = vld [vmem:[%s1 + $0x88] sm:$0xff]
    %v37 = vld [vmem:[%s1 + $0x90] sm:$0xff]
    %v38 = vld [vmem:[%s1 + $0x98] sm:$0xff]
    %v39 = vld [vmem:[%s1 + $0xa0] sm:$0xff]
    %v40 = vld [vmem:[%s1 + $0xa8] sm:$0xff]
    %v41 = vld [vmem:[%s1 + $0xb0] sm:$0xff]
    %v42 = vld [vmem:[%s1 + $0xb8] sm:$0xff]
    %v43 = vld [vmem:[%s1 + $0xc0] sm:$0xff]
    %v44 = vld [vmem:[%s1 + $0xc8] sm:$0xff]
    %v45 = vld [vmem:[%s1 + $0xd0] sm:$0xff]
    %v46 = vld [vmem:[%s1 + $0xd8] sm:$0xff]
    %v47 = vld [vmem:[%s1 + $0xe0] sm:$0xff]
    %v48 = vld [vmem:[%s1 + $0xe8] sm:$0xff]
    %v49 = vld [vmem:[%s1 + $0xf0] sm:$0xff]
    %v50 = vld [vmem:[%s1 + $0xf8] sm:$0xff]
    %v51 = vld [vmem:[%s2] sm:$0xff]
    %53 = vset.pattern.permute.xlu0 0
    %54 = vperm.xlu0 %53, %v51
    %v55 = vpop.permute.xlu0 %54
    %vm57 = vcmask 261120
    %v59 = vsel %vm57, %v18, 0
    %v62 = vsel %vm57, %v19, 0
    %v65 = vsel %vm57, %v20, 0
    %v68 = vsel %vm57, %v21, 0
    %v71 = vsel %vm57, %v22, 0
    %v74 = vsel %vm57, %v23, 0
    %v77 = vsel %vm57, %v24, 0
    %v80 = vsel %vm57, %v25, 0
    %v83 = vsel %vm57, %v26, 0
    %v86 = vsel %vm57, %v27, 0
    %v89 = vsel %vm57, %v28, 0
    %v92 = vsel %vm57, %v29, 0
    %v95 = vsel %vm57, %v30, 0
    %v98 = vsel %vm57, %v31, 0
    %v101 = vsel %vm57, %v32, 0
    %v104 = vsel %vm57, %v33, 0
    %v107 = vsel %vm57, %v34, 0
    %v110 = vsel %vm57, %v35, 0
    %v113 = vsel %vm57, %v36, 0
    %v116 = vsel %vm57, %v37, 0
    %v119 = vsel %vm57, %v38, 0
    %v122 = vsel %vm57, %v39, 0
    %v125 = vsel %vm57, %v40, 0
    %v128 = vsel %vm57, %v41, 0
    %v131 = vsel %vm57, %v42, 0
    %v134 = vsel %vm57, %v43, 0
    %v137 = vsel %vm57, %v44, 0
    %v140 = vsel %vm57, %v45, 0
    %v143 = vsel %vm57, %v46, 0
    %v146 = vsel %vm57, %v47, 0
    %v149 = vsel %vm57, %v48, 0
    %v152 = vsel %vm57, %v49, 0
    %v155 = vsel %vm57, %v50, 0
    %157 = vmatprep.subr.mxu0 0.0
    %158 = vmatpush1.xpose.msra.mxu0 %v107
    %159 = vmatprep.subr.mxu0 0.0
    %160 = vmatpush1.xpose.msra.mxu0 %v104
    %161 = vmatprep.subr.mxu0 0.0
    %162 = vmatpush1.xpose.msra.mxu0 %v101
    %163 = vmatprep.subr.mxu0 0.0
    %164 = vmatpush1.xpose.msra.mxu0 %v98
    %165 = vmatprep.subr.mxu0 0.0
    %166 = vmatpush1.xpose.msra.mxu0 %v95
    %167 = vmatprep.subr.mxu0 0.0
    %168 = vmatpush1.xpose.msra.mxu0 %v92
    %169 = vmatprep.subr.mxu0 0.0
    %170 = vmatpush1.xpose.msra.mxu0 %v89
    %171 = vmatprep.subr.mxu0 0.0
    %172 = vmatpush1.xpose.msra.mxu0 %v86
    %173 = vmatprep.subr.mxu0 0.0
    %174 = vmatpush1.xpose.msra.mxu0 %v83
    %175 = vmatprep.subr.mxu0 0.0
    %176 = vmatpush1.xpose.msra.mxu0 %v80
    %177 = vmatprep.subr.mxu0 0.0
    %178 = vmatpush1.xpose.msra.mxu0 %v77
    %179 = vmatprep.subr.mxu0 0.0
    %180 = vmatpush1.xpose.msra.mxu0 %v74
    %181 = vmatprep.subr.mxu0 0.0
    %182 = vmatpush1.xpose.msra.mxu0 %v71
    %183 = vmatprep.subr.mxu0 0.0
    %184 = vmatpush1.xpose.msra.mxu0 %v68
    %185 = vmatprep.subr.mxu0 0.0
    %186 = vmatpush1.xpose.msra.mxu0 %v65
    %187 = vmatprep.subr.mxu0 0.0
    %188 = vmatpush1.xpose.msra.mxu0 %v62
    %189 = vmatprep.subr.mxu0 0.0
    %190 = vmatpush2.xpose.msra.mxu0 %v155
    %191 = vmatprep.subr.mxu0 0.0
    %192 = vmatpush2.xpose.msra.mxu0 %v152
    %193 = vmatprep.subr.mxu0 0.0
    %194 = vmatpush2.xpose.msra.mxu0 %v149
    %195 = vmatprep.subr.mxu0 0.0
    %196 = vmatpush2.xpose.msra.mxu0 %v146
    %197 = vmatprep.subr.mxu0 0.0
    %198 = vmatpush2.xpose.msra.mxu0 %v143
    %199 = vmatprep.subr.mxu0 0.0
    %200 = vmatpush2.xpose.msra.mxu0 %v140
    %201 = vmatprep.subr.mxu0 0.0
    %202 = vmatpush2.xpose.msra.mxu0 %v137
    %203 = vmatprep.subr.mxu0 0.0
    %204 = vmatpush2.xpose.msra.mxu0 %v134
    %205 = vmatprep.subr.mxu0 0.0
    %206 = vmatpush2.xpose.msra.mxu0 %v131
    %207 = vmatprep.subr.mxu0 0.0
    %208 = vmatpush2.xpose.msra.mxu0 %v128
    %209 = vmatprep.subr.mxu0 0.0
    %210 = vmatpush2.xpose.msra.mxu0 %v125
    %211 = vmatprep.subr.mxu0 0.0
    %212 = vmatpush2.xpose.msra.mxu0 %v122
    %213 = vmatprep.subr.mxu0 0.0
    %214 = vmatpush2.xpose.msra.mxu0 %v119
    %215 = vmatprep.subr.mxu0 0.0
    %216 = vmatpush2.xpose.msra.mxu0 %v116
    %217 = vmatprep.subr.mxu0 0.0
    %218 = vmatpush2.xpose.msra.mxu0 %v113
    %219 = vmatprep.subr.mxu0 0.0
    %220 = vmatpush2.xpose.msra.mxu0 %v110
    %221 = vmatprep.mubr.f32.mxu0 0.0
    %222 = vmatmul.mubr.f32.gmra.mxu0 %v59
    %v223 = vpop.f32.mrf.mxu0
    %v224 = vadd.f32 %v55, %v223
    %v225 = vpop.f32.mrf.mxu0
    %v226 = vadd.f32 %v55, %v225
    %227 = vdwg.mxu0
    %v228 = vld [vmem:[%s3] sm:$0x3]
    %v230 = vlaneseq
    %v231 = vshrl.u32 %v230, 7
    %v232 = vsub.s32 0, %v231
    %v233 = vrot.slane %v228, %v232
    %v234 = vlaneseq
    %v235 = vshrl.u32 %v234, 7
    %v236 = vsub.s32 1, %v235
    %v237 = vrot.slane %v228, %v236
    %v240 = vadd.f32 %v224, %v233
    %v241 = vadd.f32 %v226, %v237
    %242 = vst [vmem:[#allocation2] sm:$0xff] %v240
    %243 = vst [vmem:[#allocation2 + $0x8] sm:$0xff] %v241
    // Predicated region
    $region18: #{tpu_custom_call.1} parent=1 // pred_check
      _
    $region19: #{tpu_custom_call.1} parent=1 // pred_check_branch
      %245 = sbr.rel (0) target = $region21
    $region20: #{tpu_custom_call.1} parent=1 // pred_region
      %s247 = ssub.s32 256, 256
      %248 = vsyncadd [#allocation3], %s247
      %s250 = sshll.u32 [#allocation2], 4
      %s251 = int_to_ptr.vmem [resolvable:$true] %s250
      %253 = dma.vmem_to_hbm [thread:$0]  %s251, 256, %s4, [#allocation3]
    $region21: #{tpu_custom_call.1} parent=1 // pred_fallthru
      _
    // Predicated region
    $region22: #{tpu_custom_call.1} parent=1 // pred_check
      _
    $region23: #{tpu_custom_call.1} parent=1 // pred_check_branch
      %255 = sbr.rel (0) target = $region25
    $region24: #{tpu_custom_call.1} parent=1 // pred_region
      %256 = dma.done [#allocation3], 256
    $region25: #{tpu_custom_call.1} parent=1 // pred_fallthru
      _
    %257 = vsyncpa [#allocation3], 1

</llo_original>
